<compile_context>
chip_gen: v5e
topology: v5e:2x2
jax: 0.10.0
libtpu: 0.0.40
codegen_flags: <defaults>
</compile_context>

<pallas_src>
import jax
import jax.numpy as jnp
from jax.experimental import pallas as pl
from jax.experimental.pallas import tpu as pltpu

DROP_P = 0.05
LEAKY_SLOPE = 0.2
BN_EPS = 1e-5


def _context_block_kernel(x_ref, u_ref, wstack_ref, wep_ref, bands_ref,
                          vecs_ref, out_ref):
    C, NL = out_ref.shape

    # Packed per-channel vectors: [conv_b, embed_b + pooled_b, gamma, beta].
    vecs = vecs_ref[...]
    cb, bias_ep = vecs[:, 0:1], vecs[:, 1:2]
    gamma, beta = vecs[:, 2:3], vecs[:, 3:4]

    # ---- dropout (p=0.05, training). 1/(1-p) is folded into wstack. ----
    keep = u_ref[...] >= jnp.float32(DROP_P)
    xd = jnp.where(keep, x_ref[...], 0.0)

    # ---- Conv1d(k=3, pad=1) ----
    # One dot mixes channels for all three taps at once; the t-1 / t+1 shifts
    # (zeroed at per-sample segment boundaries) are banded MXU matmuls.
    u_all = jnp.dot(wstack_ref[...], xd,
                    preferred_element_type=jnp.float32)          # (3C, NL)
    shift_prev = bands_ref[0]     # picks x[t-1], zero at segment starts
    shift_next = bands_ref[1]     # picks x[t+1], zero at segment ends
    pool_band = bands_ref[2]      # k=7 mean, 1/7 folded in, segment-blocked
    y = (jnp.dot(u_all[0:C], shift_prev, preferred_element_type=jnp.float32)
         + u_all[C:2 * C]
         + jnp.dot(u_all[2 * C:3 * C], shift_next,
                   preferred_element_type=jnp.float32)
         + cb)                                                    # (C, NL)

    # ---- avg_pool1d(k=7, stride=1, pad=3, count_include_pad=True) ----
    pooled = jnp.dot(y, pool_band, preferred_element_type=jnp.float32)

    # ---- two 1x1 convs fused into one dot, add, leaky_relu(0.2) ----
    z = jnp.concatenate([y, pooled], axis=0)                      # (2C, NL)
    s = jnp.dot(wep_ref[...], z, preferred_element_type=jnp.float32) + bias_ep
    act = jnp.where(s >= 0.0, s, jnp.float32(LEAKY_SLOPE) * s)

    # ---- BatchNorm1d (training): one-pass batch stats per channel ----
    inv_cnt = jnp.float32(1.0 / NL)
    mean = jnp.sum(act, axis=1, keepdims=True) * inv_cnt
    ex2 = jnp.sum(act * act, axis=1, keepdims=True) * inv_cnt
    var = jnp.maximum(ex2 - mean * mean, 0.0)
    scale = gamma * jax.lax.rsqrt(var + jnp.float32(BN_EPS))
    out_ref[...] = (act * scale + (beta - mean * scale)).astype(out_ref.dtype)


@jax.jit
def context_block_forward(x, params, drop_key):
    """x: (N, C, L) float32. Returns (N, C, L) float32."""
    N, C, L = x.shape
    NL = N * L
    inv_keep = 1.0 / (1.0 - DROP_P)

    conv_w = params["conv_w"]                                     # (C, C, 3)
    # Dropout rescale folded into the conv taps (the conv is linear in x).
    w_stack = jnp.concatenate(
        [conv_w[:, :, 0], conv_w[:, :, 1], conv_w[:, :, 2]],
        axis=0) * jnp.float32(inv_keep)                           # (3C, C)
    wep = jnp.concatenate(
        [params["embed_conv_w"], params["embed_pooled_w"]], axis=1)  # (C, 2C)
    vecs = jnp.stack(
        [params["conv_b"],
         params["embed_conv_b"] + params["embed_pooled_b"],
         params["bn_gamma"], params["bn_beta"]],
        axis=1).astype(jnp.float32)                               # (C, 4)

    # Band matrices over the fused (N*L) lane axis: +/-1 temporal shifts and
    # the k=7 average pool, with per-sample (segment) boundaries built in and
    # the 1/7 pool divisor folded in.
    idx = jnp.arange(NL)
    same_seg = (idx[:, None] // L) == (idx[None, :] // L)
    delta = idx[None, :] - idx[:, None]                           # j - i
    shift_prev = jnp.where(same_seg & (delta == 1), 1.0, 0.0)
    shift_next = jnp.where(same_seg & (delta == -1), 1.0, 0.0)
    pool_band = jnp.where(same_seg & (jnp.abs(delta) <= 3), 1.0 / 7.0, 0.0)
    bands = jnp.stack([shift_prev, shift_next, pool_band]).astype(jnp.float32)

    # Batch folded into the lane axis: (N, C, L) -> (C, N*L).
    x2d = jnp.transpose(x, (1, 0, 2)).reshape(C, NL)
    u = jax.random.uniform(drop_key, (C, NL), jnp.float32)

    vmem = pl.BlockSpec(memory_space=pltpu.MemorySpace.VMEM)
    out2d = pl.pallas_call(
        _context_block_kernel,
        out_shape=jax.ShapeDtypeStruct((C, NL), jnp.float32),
        in_specs=[vmem] * 6,
        out_specs=vmem,
    )(x2d, u, w_stack, wep, bands, vecs)

    return jnp.transpose(out2d.reshape(C, N, L), (1, 0, 2))


def init_params(key, channels):
    ks = jax.random.split(key, 8)
    s = 0.1
    return {
        "conv_w": jax.random.normal(ks[0], (channels, channels, 3), jnp.float32) * s,
        "conv_b": jax.random.normal(ks[1], (channels,), jnp.float32) * s,
        "embed_conv_w": jax.random.normal(ks[2], (channels, channels), jnp.float32) * s,
        "embed_conv_b": jax.random.normal(ks[3], (channels,), jnp.float32) * s,
        "embed_pooled_w": jax.random.normal(ks[4], (channels, channels), jnp.float32) * s,
        "embed_pooled_b": jax.random.normal(ks[5], (channels,), jnp.float32) * s,
        "bn_gamma": 1.0 + jax.random.normal(ks[6], (channels,), jnp.float32) * s,
        "bn_beta": jax.random.normal(ks[7], (channels,), jnp.float32) * s,
    }


if __name__ == "__main__":
    N, C, L = 2, 8, 128
    key = jax.random.PRNGKey(0)
    pkey, xkey, dkey = jax.random.split(key, 3)
    params = init_params(pkey, C)
    x = jax.random.normal(xkey, (N, C, L), jnp.float32)

    out = context_block_forward(x, params, dkey)
    out = jax.block_until_ready(out)
    assert out.shape == (N, C, L) and out.dtype == jnp.float32
    assert bool(jnp.all(jnp.isfinite(out)))
    print("KERNEL_OK")
</pallas_src>

<mosaic_0001>
module attributes {stable_mosaic.version = 11 : i64} {
  func.func @_context_block_kernel(%arg0: memref<8x256xf32, #tpu.memory_space<vmem>>, %arg1: memref<8x256xf32, #tpu.memory_space<vmem>>, %arg2: memref<24x8xf32, #tpu.memory_space<vmem>>, %arg3: memref<8x16xf32, #tpu.memory_space<vmem>>, %arg4: memref<3x256x256xf32, #tpu.memory_space<vmem>>, %arg5: memref<8x4xf32, #tpu.memory_space<vmem>>, %arg6: memref<8x256xf32, #tpu.memory_space<vmem>>) attributes {dimension_semantics = [], scalar_prefetch = 0 : i64, scratch_operands = 0 : i64, tpu.core_type = #tpu.core_type<tc>} {
    %c0 = arith.constant 0 : index
    %c0_0 = arith.constant 0 : index
    %0 = vector.load %arg5[%c0, %c0_0] : memref<8x4xf32, #tpu.memory_space<vmem>>, vector<8x4xf32>
    %1 = vector.extract_strided_slice %0 {offsets = [0, 0], sizes = [8, 1], strides = [1, 1]} : vector<8x4xf32> to vector<8x1xf32>
    %2 = vector.extract_strided_slice %0 {offsets = [0, 1], sizes = [8, 1], strides = [1, 1]} : vector<8x4xf32> to vector<8x1xf32>
    %3 = vector.extract_strided_slice %0 {offsets = [0, 2], sizes = [8, 1], strides = [1, 1]} : vector<8x4xf32> to vector<8x1xf32>
    %4 = vector.extract_strided_slice %0 {offsets = [0, 3], sizes = [8, 1], strides = [1, 1]} : vector<8x4xf32> to vector<8x1xf32>
    %c0_1 = arith.constant 0 : index
    %c0_2 = arith.constant 0 : index
    %5 = vector.load %arg1[%c0_1, %c0_2] : memref<8x256xf32, #tpu.memory_space<vmem>>, vector<8x256xf32>
    %cst = arith.constant 5.000000e-02 : f32
    %6 = vector.broadcast %cst : f32 to vector<8x256xf32>
    %7 = arith.cmpf oge, %5, %6 : vector<8x256xf32>
    %c0_3 = arith.constant 0 : index
    %c0_4 = arith.constant 0 : index
    %8 = vector.load %arg0[%c0_3, %c0_4] : memref<8x256xf32, #tpu.memory_space<vmem>>, vector<8x256xf32>
    %cst_5 = arith.constant 0.000000e+00 : f32
    %9 = vector.broadcast %cst_5 : f32 to vector<8x256xf32>
    %10 = arith.select %7, %8, %9 : vector<8x256xi1>, vector<8x256xf32>
    %c0_6 = arith.constant 0 : index
    %c0_7 = arith.constant 0 : index
    %11 = vector.load %arg2[%c0_6, %c0_7] : memref<24x8xf32, #tpu.memory_space<vmem>>, vector<24x8xf32>
    %cst_8 = arith.constant dense<0.000000e+00> : vector<24x256xf32>
    %12 = tpu.matmul %11, %10, %cst_8 {dimension_numbers = #tpu.dot_dimension_numbers<[1], [0], [0], [1], [0, 0, 1, 1], [], []>} : vector<24x8xf32>, vector<8x256xf32>, vector<24x256xf32> -> vector<24x256xf32>
    %c0_9 = arith.constant 0 : index
    %c0_10 = arith.constant 0 : index
    %c0_11 = arith.constant 0 : index
    %13 = vector.load %arg4[%c0_9, %c0_10, %c0_11] : memref<3x256x256xf32, #tpu.memory_space<vmem>>, vector<1x256x256xf32>
    %14 = vector.shape_cast %13 : vector<1x256x256xf32> to vector<256x256xf32>
    %c1 = arith.constant 1 : index
    %c0_12 = arith.constant 0 : index
    %c0_13 = arith.constant 0 : index
    %15 = vector.load %arg4[%c1, %c0_12, %c0_13] : memref<3x256x256xf32, #tpu.memory_space<vmem>>, vector<1x256x256xf32>
    %16 = vector.shape_cast %15 : vector<1x256x256xf32> to vector<256x256xf32>
    %c2 = arith.constant 2 : index
    %c0_14 = arith.constant 0 : index
    %c0_15 = arith.constant 0 : index
    %17 = vector.load %arg4[%c2, %c0_14, %c0_15] : memref<3x256x256xf32, #tpu.memory_space<vmem>>, vector<1x256x256xf32>
    %18 = vector.shape_cast %17 : vector<1x256x256xf32> to vector<256x256xf32>
    %19 = vector.extract_strided_slice %12 {offsets = [0, 0], sizes = [8, 256], strides = [1, 1]} : vector<24x256xf32> to vector<8x256xf32>
    %cst_16 = arith.constant dense<0.000000e+00> : vector<8x256xf32>
    %20 = tpu.matmul %19, %14, %cst_16 {dimension_numbers = #tpu.dot_dimension_numbers<[1], [0], [0], [1], [0, 0, 1, 1], [], []>} : vector<8x256xf32>, vector<256x256xf32>, vector<8x256xf32> -> vector<8x256xf32>
    %21 = vector.extract_strided_slice %12 {offsets = [8, 0], sizes = [8, 256], strides = [1, 1]} : vector<24x256xf32> to vector<8x256xf32>
    %22 = arith.addf %20, %21 : vector<8x256xf32>
    %23 = vector.extract_strided_slice %12 {offsets = [16, 0], sizes = [8, 256], strides = [1, 1]} : vector<24x256xf32> to vector<8x256xf32>
    %cst_17 = arith.constant dense<0.000000e+00> : vector<8x256xf32>
    %24 = tpu.matmul %23, %16, %cst_17 {dimension_numbers = #tpu.dot_dimension_numbers<[1], [0], [0], [1], [0, 0, 1, 1], [], []>} : vector<8x256xf32>, vector<256x256xf32>, vector<8x256xf32> -> vector<8x256xf32>
    %25 = arith.addf %22, %24 : vector<8x256xf32>
    %26 = vector.broadcast %1 : vector<8x1xf32> to vector<8x256xf32>
    %27 = arith.addf %25, %26 : vector<8x256xf32>
    %cst_18 = arith.constant dense<0.000000e+00> : vector<8x256xf32>
    %28 = tpu.matmul %27, %18, %cst_18 {dimension_numbers = #tpu.dot_dimension_numbers<[1], [0], [0], [1], [0, 0, 1, 1], [], []>} : vector<8x256xf32>, vector<256x256xf32>, vector<8x256xf32> -> vector<8x256xf32>
    %29 = tpu.concatenate %27, %28 in 0 : vector<8x256xf32>, vector<8x256xf32> -> vector<16x256xf32>
    %c0_19 = arith.constant 0 : index
    %c0_20 = arith.constant 0 : index
    %30 = vector.load %arg3[%c0_19, %c0_20] : memref<8x16xf32, #tpu.memory_space<vmem>>, vector<8x16xf32>
    %cst_21 = arith.constant dense<0.000000e+00> : vector<8x256xf32>
    %31 = tpu.matmul %30, %29, %cst_21 {dimension_numbers = #tpu.dot_dimension_numbers<[1], [0], [0], [1], [0, 0, 1, 1], [], []>} : vector<8x16xf32>, vector<16x256xf32>, vector<8x256xf32> -> vector<8x256xf32>
    %32 = vector.broadcast %2 : vector<8x1xf32> to vector<8x256xf32>
    %33 = arith.addf %31, %32 : vector<8x256xf32>
    %cst_22 = arith.constant 0.000000e+00 : f32
    %34 = vector.broadcast %cst_22 : f32 to vector<8x256xf32>
    %35 = arith.cmpf oge, %33, %34 : vector<8x256xf32>
    %cst_23 = arith.constant 2.000000e-01 : f32
    %36 = vector.broadcast %cst_23 : f32 to vector<8x256xf32>
    %37 = arith.mulf %36, %33 : vector<8x256xf32>
    %38 = arith.select %35, %33, %37 : vector<8x256xi1>, vector<8x256xf32>
    %cst_24 = arith.constant dense<0.000000e+00> : vector<8xf32>
    %39 = vector.multi_reduction <add>, %38, %cst_24 [1] : vector<8x256xf32> to vector<8xf32>
    %40 = vector.shape_cast %39 : vector<8xf32> to vector<8x1xf32>
    %cst_25 = arith.constant 3.906250e-03 : f32
    %41 = vector.broadcast %cst_25 : f32 to vector<8x1xf32>
    %42 = arith.mulf %40, %41 : vector<8x1xf32>
    %43 = arith.mulf %38, %38 : vector<8x256xf32>
    %cst_26 = arith.constant dense<0.000000e+00> : vector<8xf32>
    %44 = vector.multi_reduction <add>, %43, %cst_26 [1] : vector<8x256xf32> to vector<8xf32>
    %45 = vector.shape_cast %44 : vector<8xf32> to vector<8x1xf32>
    %cst_27 = arith.constant 3.906250e-03 : f32
    %46 = vector.broadcast %cst_27 : f32 to vector<8x1xf32>
    %47 = arith.mulf %45, %46 : vector<8x1xf32>
    %48 = arith.mulf %42, %42 : vector<8x1xf32>
    %49 = arith.subf %47, %48 : vector<8x1xf32>
    %cst_28 = arith.constant 0.000000e+00 : f32
    %50 = vector.broadcast %cst_28 : f32 to vector<8x1xf32>
    %51 = arith.maximumf %49, %50 : vector<8x1xf32>
    %cst_29 = arith.constant 9.99999974E-6 : f32
    %52 = vector.broadcast %cst_29 : f32 to vector<8x1xf32>
    %53 = arith.addf %51, %52 : vector<8x1xf32>
    %54 = math.rsqrt %53 : vector<8x1xf32>
    %55 = arith.mulf %3, %54 : vector<8x1xf32>
    %56 = vector.broadcast %55 : vector<8x1xf32> to vector<8x256xf32>
    %57 = arith.mulf %38, %56 : vector<8x256xf32>
    %58 = arith.mulf %42, %55 : vector<8x1xf32>
    %59 = arith.subf %4, %58 : vector<8x1xf32>
    %60 = vector.broadcast %59 : vector<8x1xf32> to vector<8x256xf32>
    %61 = arith.addf %57, %60 : vector<8x256xf32>
    %c0_30 = arith.constant 0 : index
    %c0_31 = arith.constant 0 : index
    %62 = vector.load %arg6[%c0_30, %c0_31] : memref<8x256xf32, #tpu.memory_space<vmem>>, vector<8x256xf32>
    tpu.vector_store %arg6[%c0_30, %c0_31], %61 {strides = array<i32>} : memref<8x256xf32, #tpu.memory_space<vmem>>, vector<8x256xf32>,
    return
  }
}

</mosaic_0001>

<llo_original>
// kernel: context_block_forward.1
$region0: #{context_block_forward.1}
  #allocation0 [shape = 'u32[]', space=smem, size = 0x4, offset = 0x4, fixed_abs, tag = 'smem constant byte address 0x4 - core index']
  #allocation1 [shape = 'u32[72,128]{1,0:T(1,128)}', space=vmem, size = 0x9000, scoped, tag = 'internal scratch']
  %s0 = inlined_call_operand.vmem [shape: f32[8,256], index: 0, kind: input, shape index: {}]
  %s1 = inlined_call_operand.vmem [shape: f32[8,256], index: 1, kind: input, shape index: {}]
  %s2 = inlined_call_operand.vmem [shape: f32[24,8], index: 2, kind: input, shape index: {}]
  %s3 = inlined_call_operand.vmem [shape: f32[8,16], index: 3, kind: input, shape index: {}]
  %s4 = inlined_call_operand.vmem [shape: f32[3,256,256], index: 4, kind: input, shape index: {}]
  %s5 = inlined_call_operand.vmem [shape: f32[8,4], index: 5, kind: input, shape index: {}]
  %s6 = inlined_call_operand.hbm [shape: f32[8,256], index: 6, kind: output, shape index: {}]
  %s7 = sld [smem:[#allocation0]]
  $region34: #{context_block_forward.1} parent=0
    _
  %s9 = ssub.s32 1, %s7
  %s10 = scalar_select 0, %s9, %s7
  $region1: #{context_block_forward.1} parent=0
    #allocation2 [shape = 'u8[8192]{0}', space=vmem, size = 0x2000, scoped, tag = 'output window, operand 0, single buffered']
    #allocation3 [shape = 's32[1]{0}', space=sflag, size = 0x4, scoped, tag = 'scoped memory for context_block_forward.1']
    %11 = vsyncpa [#allocation3], 0
    // Predicated region
    $region2: #{context_block_forward.1} parent=1 // pred_check
      _
    $region3: #{context_block_forward.1} parent=1 // pred_check_branch
      %13 = sbr.rel (0) target = $region5
    $region4: #{context_block_forward.1} parent=1 // pred_region
      _
    $region5: #{context_block_forward.1} parent=1 // pred_fallthru
      _
    // Predicated region
    $region6: #{context_block_forward.1} parent=1 // pred_check
      _
    $region7: #{context_block_forward.1} parent=1 // pred_check_branch
      %15 = sbr.rel (0) target = $region9
    $region8: #{context_block_forward.1} parent=1 // pred_region
      _
    $region9: #{context_block_forward.1} parent=1 // pred_fallthru
      _
    // Predicated region
    $region10: #{context_block_forward.1} parent=1 // pred_check
      _
    $region11: #{context_block_forward.1} parent=1 // pred_check_branch
      %17 = sbr.rel (0) target = $region13
    $region12: #{context_block_forward.1} parent=1 // pred_region
      _
    $region13: #{context_block_forward.1} parent=1 // pred_fallthru
      _
    // Predicated region
    $region14: #{context_block_forward.1} parent=1 // pred_check
      _
    $region15: #{context_block_forward.1} parent=1 // pred_check_branch
      %19 = sbr.rel (0) target = $region17
    $region16: #{context_block_forward.1} parent=1 // pred_region
      _
    $region17: #{context_block_forward.1} parent=1 // pred_fallthru
      _
    // Predicated region
    $region18: #{context_block_forward.1} parent=1 // pred_check
      _
    $region19: #{context_block_forward.1} parent=1 // pred_check_branch
      %21 = sbr.rel (0) target = $region21
    $region20: #{context_block_forward.1} parent=1 // pred_region
      _
    $region21: #{context_block_forward.1} parent=1 // pred_fallthru
      _
    // Predicated region
    $region22: #{context_block_forward.1} parent=1 // pred_check
      _
    $region23: #{context_block_forward.1} parent=1 // pred_check_branch
      %23 = sbr.rel (0) target = $region25
    $region24: #{context_block_forward.1} parent=1 // pred_region
      _
    $region25: #{context_block_forward.1} parent=1 // pred_fallthru
      _
    %v24 = vld [vmem:[%s5] sm:$0xff]
    %v25 = vld [vmem:[%s1] sm:$0xff]
    %v26 = vld [vmem:[%s1 + $0x8] sm:$0xff]
    %vm27 = vcmp.ge.f32.partialorder %v25, 0.05
    %vm28 = vcmp.ge.f32.partialorder %v26, 0.05
    %v29 = vld [vmem:[%s0] sm:$0xff]
    %v30 = vld [vmem:[%s0 + $0x8] sm:$0xff]
    %v31 = vsel %vm27, %v29, 0.0
    %v32 = vsel %vm28, %v30, 0.0
    %v33 = vld [vmem:[%s2] sm:$0xff]
    %v34 = vld [vmem:[%s2 + $0x8] sm:$0xff]
    %v35 = vld [vmem:[%s2 + $0x10] sm:$0xff]
    %vm36 = vcmask 64512
    %v38 = vsel %vm36, %v33, 0
    %v41 = vsel %vm36, %v34, 0
    %v44 = vsel %vm36, %v35, 0
    %46 = vmatpush.msra.mxu0 0.0
    %47 = vmatpush.msra.mxu0 0.0
    %48 = vmatpush.msra.mxu0 0.0
    %49 = vmatpush.msra.mxu0 0.0
    %50 = vmatpush.msra.mxu0 0.0
    %51 = vmatpush.msra.mxu0 0.0
    %52 = vmatpush.msra.mxu0 0.0
    %53 = vmatpush.msra.mxu0 0.0
    %54 = vmatpush.msra.mxu0 0.0
    %55 = vmatpush.msra.mxu0 0.0
    %56 = vmatpush.msra.mxu0 0.0
    %57 = vmatpush.msra.mxu0 0.0
    %58 = vmatpush.msra.mxu0 0.0
    %59 = vmatpush.msra.mxu0 0.0
    %60 = vmatpush.msra.mxu0 0.0
    %61 = vmatpush.msra.mxu0 %v31
    %62 = vmatmul.f32.gmra.mxu0 %v38
    %v63 = vpop.f32.mrf.mxu0
    %v64 = vadd.f32 0.0, %v63
    %65 = vmatmul.f32.gmra.mxu0 %v41
    %v66 = vpop.f32.mrf.mxu0
    %v67 = vadd.f32 0.0, %v66
    %68 = vmatmul.f32.gmra.mxu0 %v44
    %v69 = vpop.f32.mrf.mxu0
    %v70 = vadd.f32 0.0, %v69
    %71 = vdwg.mxu0
    %72 = vmatpush.msra.mxu0 0.0
    %73 = vmatpush.msra.mxu0 0.0
    %74 = vmatpush.msra.mxu0 0.0
    %75 = vmatpush.msra.mxu0 0.0
    %76 = vmatpush.msra.mxu0 0.0
    %77 = vmatpush.msra.mxu0 0.0
    %78 = vmatpush.msra.mxu0 0.0
    %79 = vmatpush.msra.mxu0 0.0
    %80 = vmatpush.msra.mxu0 0.0
    %81 = vmatpush.msra.mxu0 0.0
    %82 = vmatpush.msra.mxu0 0.0
    %83 = vmatpush.msra.mxu0 0.0
    %84 = vmatpush.msra.mxu0 0.0
    %85 = vmatpush.msra.mxu0 0.0
    %86 = vmatpush.msra.mxu0 0.0
    %87 = vmatpush.msra.mxu0 %v32
    %88 = vmatmul.f32.gmra.mxu0 %v38
    %v89 = vpop.f32.mrf.mxu0
    %v90 = vadd.f32 0.0, %v89
    %91 = vmatmul.f32.gmra.mxu0 %v41
    %v92 = vpop.f32.mrf.mxu0
    %v93 = vadd.f32 0.0, %v92
    %94 = vmatmul.f32.gmra.mxu0 %v44
    %v95 = vpop.f32.mrf.mxu0
    %v96 = vadd.f32 0.0, %v95
    %97 = vdwg.mxu0
    %v98 = vld [vmem:[%s4] sm:$0xff]
    %v99 = vld [vmem:[%s4 + $0x8] sm:$0xff]
    %v100 = vld [vmem:[%s4 + $0x10] sm:$0xff]
    %v101 = vld [vmem:[%s4 + $0x18] sm:$0xff]
    %v102 = vld [vmem:[%s4 + $0x20] sm:$0xff]
    %v103 = vld [vmem:[%s4 + $0x28] sm:$0xff]
    %v104 = vld [vmem:[%s4 + $0x30] sm:$0xff]
    %v105 = vld [vmem:[%s4 + $0x38] sm:$0xff]
    %v106 = vld [vmem:[%s4 + $0x40] sm:$0xff]
    %v107 = vld [vmem:[%s4 + $0x48] sm:$0xff]
    %v108 = vld [vmem:[%s4 + $0x50] sm:$0xff]
    %v109 = vld [vmem:[%s4 + $0x58] sm:$0xff]
    %v110 = vld [vmem:[%s4 + $0x60] sm:$0xff]
    %v111 = vld [vmem:[%s4 + $0x68] sm:$0xff]
    %v112 = vld [vmem:[%s4 + $0x70] sm:$0xff]
    %v113 = vld [vmem:[%s4 + $0x78] sm:$0xff]
    %v114 = vld [vmem:[%s4 + $0x80] sm:$0xff]
    %v115 = vld [vmem:[%s4 + $0x88] sm:$0xff]
    %v116 = vld [vmem:[%s4 + $0x90] sm:$0xff]
    %v117 = vld [vmem:[%s4 + $0x98] sm:$0xff]
    %v118 = vld [vmem:[%s4 + $0xa0] sm:$0xff]
    %v119 = vld [vmem:[%s4 + $0xa8] sm:$0xff]
    %v120 = vld [vmem:[%s4 + $0xb0] sm:$0xff]
    %v121 = vld [vmem:[%s4 + $0xb8] sm:$0xff]
    %v122 = vld [vmem:[%s4 + $0xc0] sm:$0xff]
    %v123 = vld [vmem:[%s4 + $0xc8] sm:$0xff]
    %v124 = vld [vmem:[%s4 + $0xd0] sm:$0xff]
    %v125 = vld [vmem:[%s4 + $0xd8] sm:$0xff]
    %v126 = vld [vmem:[%s4 + $0xe0] sm:$0xff]
    %v127 = vld [vmem:[%s4 + $0xe8] sm:$0xff]
    %v128 = vld [vmem:[%s4 + $0xf0] sm:$0xff]
    %v129 = vld [vmem:[%s4 + $0xf8] sm:$0xff]
    %v130 = vld [vmem:[%s4 + $0x100] sm:$0xff]
    %v131 = vld [vmem:[%s4 + $0x108] sm:$0xff]
    %v132 = vld [vmem:[%s4 + $0x110] sm:$0xff]
    %v133 = vld [vmem:[%s4 + $0x118] sm:$0xff]
    %v134 = vld [vmem:[%s4 + $0x120] sm:$0xff]
    %v135 = vld [vmem:[%s4 + $0x128] sm:$0xff]
    %v136 = vld [vmem:[%s4 + $0x130] sm:$0xff]
    %v137 = vld [vmem:[%s4 + $0x138] sm:$0xff]
    %v138 = vld [vmem:[%s4 + $0x140] sm:$0xff]
    %v139 = vld [vmem:[%s4 + $0x148] sm:$0xff]
    %v140 = vld [vmem:[%s4 + $0x150] sm:$0xff]
    %v141 = vld [vmem:[%s4 + $0x158] sm:$0xff]
    %v142 = vld [vmem:[%s4 + $0x160] sm:$0xff]
    %v143 = vld [vmem:[%s4 + $0x168] sm:$0xff]
    %v144 = vld [vmem:[%s4 + $0x170] sm:$0xff]
    %v145 = vld [vmem:[%s4 + $0x178] sm:$0xff]
    %v146 = vld [vmem:[%s4 + $0x180] sm:$0xff]
    %v147 = vld [vmem:[%s4 + $0x188] sm:$0xff]
    %v148 = vld [vmem:[%s4 + $0x190] sm:$0xff]
    %v149 = vld [vmem:[%s4 + $0x198] sm:$0xff]
    %v150 = vld [vmem:[%s4 + $0x1a0] sm:$0xff]
    %v151 = vld [vmem:[%s4 + $0x1a8] sm:$0xff]
    %v152 = vld [vmem:[%s4 + $0x1b0] sm:$0xff]
    %v153 = vld [vmem:[%s4 + $0x1b8] sm:$0xff]
    %v154 = vld [vmem:[%s4 + $0x1c0] sm:$0xff]
    %v155 = vld [vmem:[%s4 + $0x1c8] sm:$0xff]
    %v156 = vld [vmem:[%s4 + $0x1d0] sm:$0xff]
    %v157 = vld [vmem:[%s4 + $0x1d8] sm:$0xff]
    %v158 = vld [vmem:[%s4 + $0x1e0] sm:$0xff]
    %v159 = vld [vmem:[%s4 + $0x1e8] sm:$0xff]
    %v160 = vld [vmem:[%s4 + $0x1f0] sm:$0xff]
    %v161 = vld [vmem:[%s4 + $0x1f8] sm:$0xff]
    %s162 = scalar_lea.vmem %s4, 512
    %v163 = vld [vmem:[%s162] sm:$0xff]
    %v164 = vld [vmem:[%s162 + $0x8] sm:$0xff]
    %v165 = vld [vmem:[%s162 + $0x10] sm:$0xff]
    %v166 = vld [vmem:[%s162 + $0x18] sm:$0xff]
    %v167 = vld [vmem:[%s162 + $0x20] sm:$0xff]
    %v168 = vld [vmem:[%s162 + $0x28] sm:$0xff]
    %v169 = vld [vmem:[%s162 + $0x30] sm:$0xff]
    %v170 = vld [vmem:[%s162 + $0x38] sm:$0xff]
    %v171 = vld [vmem:[%s162 + $0x40] sm:$0xff]
    %v172 = vld [vmem:[%s162 + $0x48] sm:$0xff]
    %v173 = vld [vmem:[%s162 + $0x50] sm:$0xff]
    %v174 = vld [vmem:[%s162 + $0x58] sm:$0xff]
    %v175 = vld [vmem:[%s162 + $0x60] sm:$0xff]
    %v176 = vld [vmem:[%s162 + $0x68] sm:$0xff]
    %v177 = vld [vmem:[%s162 + $0x70] sm:$0xff]
    %v178 = vld [vmem:[%s162 + $0x78] sm:$0xff]
    %v179 = vld [vmem:[%s162 + $0x80] sm:$0xff]
    %v180 = vld [vmem:[%s162 + $0x88] sm:$0xff]
    %v181 = vld [vmem:[%s162 + $0x90] sm:$0xff]
    %v182 = vld [vmem:[%s162 + $0x98] sm:$0xff]
    %v183 = vld [vmem:[%s162 + $0xa0] sm:$0xff]
    %v184 = vld [vmem:[%s162 + $0xa8] sm:$0xff]
    %v185 = vld [vmem:[%s162 + $0xb0] sm:$0xff]
    %v186 = vld [vmem:[%s162 + $0xb8] sm:$0xff]
    %v187 = vld [vmem:[%s162 + $0xc0] sm:$0xff]
    %v188 = vld [vmem:[%s162 + $0xc8] sm:$0xff]
    %v189 = vld [vmem:[%s162 + $0xd0] sm:$0xff]
    %v190 = vld [vmem:[%s162 + $0xd8] sm:$0xff]
    %v191 = vld [vmem:[%s162 + $0xe0] sm:$0xff]
    %v192 = vld [vmem:[%s162 + $0xe8] sm:$0xff]
    %v193 = vld [vmem:[%s162 + $0xf0] sm:$0xff]
    %v194 = vld [vmem:[%s162 + $0xf8] sm:$0xff]
    %v195 = vld [vmem:[%s162 + $0x100] sm:$0xff]
    %v196 = vld [vmem:[%s162 + $0x108] sm:$0xff]
    %v197 = vld [vmem:[%s162 + $0x110] sm:$0xff]
    %v198 = vld [vmem:[%s162 + $0x118] sm:$0xff]
    %v199 = vld [vmem:[%s162 + $0x120] sm:$0xff]
    %v200 = vld [vmem:[%s162 + $0x128] sm:$0xff]
    %v201 = vld [vmem:[%s162 + $0x130] sm:$0xff]
    %v202 = vld [vmem:[%s162 + $0x138] sm:$0xff]
    %v203 = vld [vmem:[%s162 + $0x140] sm:$0xff]
    %v204 = vld [vmem:[%s162 + $0x148] sm:$0xff]
    %v205 = vld [vmem:[%s162 + $0x150] sm:$0xff]
    %v206 = vld [vmem:[%s162 + $0x158] sm:$0xff]
    %v207 = vld [vmem:[%s162 + $0x160] sm:$0xff]
    %v208 = vld [vmem:[%s162 + $0x168] sm:$0xff]
    %v209 = vld [vmem:[%s162 + $0x170] sm:$0xff]
    %v210 = vld [vmem:[%s162 + $0x178] sm:$0xff]
    %v211 = vld [vmem:[%s162 + $0x180] sm:$0xff]
    %v212 = vld [vmem:[%s162 + $0x188] sm:$0xff]
    %v213 = vld [vmem:[%s162 + $0x190] sm:$0xff]
    %v214 = vld [vmem:[%s162 + $0x198] sm:$0xff]
    %v215 = vld [vmem:[%s162 + $0x1a0] sm:$0xff]
    %v216 = vld [vmem:[%s162 + $0x1a8] sm:$0xff]
    %v217 = vld [vmem:[%s162 + $0x1b0] sm:$0xff]
    %v218 = vld [vmem:[%s162 + $0x1b8] sm:$0xff]
    %v219 = vld [vmem:[%s162 + $0x1c0] sm:$0xff]
    %v220 = vld [vmem:[%s162 + $0x1c8] sm:$0xff]
    %v221 = vld [vmem:[%s162 + $0x1d0] sm:$0xff]
    %v222 = vld [vmem:[%s162 + $0x1d8] sm:$0xff]
    %v223 = vld [vmem:[%s162 + $0x1e0] sm:$0xff]
    %v224 = vld [vmem:[%s162 + $0x1e8] sm:$0xff]
    %v225 = vld [vmem:[%s162 + $0x1f0] sm:$0xff]
    %v226 = vld [vmem:[%s162 + $0x1f8] sm:$0xff]
    %s227 = scalar_lea.vmem %s4, 1024
    %v228 = vld [vmem:[%s227] sm:$0xff]
    %v229 = vld [vmem:[%s227 + $0x8] sm:$0xff]
    %v230 = vld [vmem:[%s227 + $0x10] sm:$0xff]
    %v231 = vld [vmem:[%s227 + $0x18] sm:$0xff]
    %v232 = vld [vmem:[%s227 + $0x20] sm:$0xff]
    %v233 = vld [vmem:[%s227 + $0x28] sm:$0xff]
    %v234 = vld [vmem:[%s227 + $0x30] sm:$0xff]
    %v235 = vld [vmem:[%s227 + $0x38] sm:$0xff]
    %v236 = vld [vmem:[%s227 + $0x40] sm:$0xff]
    %v237 = vld [vmem:[%s227 + $0x48] sm:$0xff]
    %v238 = vld [vmem:[%s227 + $0x50] sm:$0xff]
    %v239 = vld [vmem:[%s227 + $0x58] sm:$0xff]
    %v240 = vld [vmem:[%s227 + $0x60] sm:$0xff]
    %v241 = vld [vmem:[%s227 + $0x68] sm:$0xff]
    %v242 = vld [vmem:[%s227 + $0x70] sm:$0xff]
    %v243 = vld [vmem:[%s227 + $0x78] sm:$0xff]
    %v244 = vld [vmem:[%s227 + $0x80] sm:$0xff]
    %v245 = vld [vmem:[%s227 + $0x88] sm:$0xff]
    %v246 = vld [vmem:[%s227 + $0x90] sm:$0xff]
    %v247 = vld [vmem:[%s227 + $0x98] sm:$0xff]
    %v248 = vld [vmem:[%s227 + $0xa0] sm:$0xff]
    %v249 = vld [vmem:[%s227 + $0xa8] sm:$0xff]
    %v250 = vld [vmem:[%s227 + $0xb0] sm:$0xff]
    %v251 = vld [vmem:[%s227 + $0xb8] sm:$0xff]
    %v252 = vld [vmem:[%s227 + $0xc0] sm:$0xff]
    %v253 = vld [vmem:[%s227 + $0xc8] sm:$0xff]
    %v254 = vld [vmem:[%s227 + $0xd0] sm:$0xff]
    %v255 = vld [vmem:[%s227 + $0xd8] sm:$0xff]
    %v256 = vld [vmem:[%s227 + $0xe0] sm:$0xff]
    %v257 = vld [vmem:[%s227 + $0xe8] sm:$0xff]
    %v258 = vld [vmem:[%s227 + $0xf0] sm:$0xff]
    %v259 = vld [vmem:[%s227 + $0xf8] sm:$0xff]
    %v260 = vld [vmem:[%s227 + $0x100] sm:$0xff]
    %v261 = vld [vmem:[%s227 + $0x108] sm:$0xff]
    %v262 = vld [vmem:[%s227 + $0x110] sm:$0xff]
    %v263 = vld [vmem:[%s227 + $0x118] sm:$0xff]
    %v264 = vld [vmem:[%s227 + $0x120] sm:$0xff]
    %v265 = vld [vmem:[%s227 + $0x128] sm:$0xff]
    %v266 = vld [vmem:[%s227 + $0x130] sm:$0xff]
    %v267 = vld [vmem:[%s227 + $0x138] sm:$0xff]
    %v268 = vld [vmem:[%s227 + $0x140] sm:$0xff]
    %v269 = vld [vmem:[%s227 + $0x148] sm:$0xff]
    %v270 = vld [vmem:[%s227 + $0x150] sm:$0xff]
    %v271 = vld [vmem:[%s227 + $0x158] sm:$0xff]
    %v272 = vld [vmem:[%s227 + $0x160] sm:$0xff]
    %v273 = vld [vmem:[%s227 + $0x168] sm:$0xff]
    %v274 = vld [vmem:[%s227 + $0x170] sm:$0xff]
    %v275 = vld [vmem:[%s227 + $0x178] sm:$0xff]
    %v276 = vld [vmem:[%s227 + $0x180] sm:$0xff]
    %v277 = vld [vmem:[%s227 + $0x188] sm:$0xff]
    %v278 = vld [vmem:[%s227 + $0x190] sm:$0xff]
    %v279 = vld [vmem:[%s227 + $0x198] sm:$0xff]
    %v280 = vld [vmem:[%s227 + $0x1a0] sm:$0xff]
    %v281 = vld [vmem:[%s227 + $0x1a8] sm:$0xff]
    %v282 = vld [vmem:[%s227 + $0x1b0] sm:$0xff]
    %v283 = vld [vmem:[%s227 + $0x1b8] sm:$0xff]
    %v284 = vld [vmem:[%s227 + $0x1c0] sm:$0xff]
    %v285 = vld [vmem:[%s227 + $0x1c8] sm:$0xff]
    %v286 = vld [vmem:[%s227 + $0x1d0] sm:$0xff]
    %v287 = vld [vmem:[%s227 + $0x1d8] sm:$0xff]
    %v288 = vld [vmem:[%s227 + $0x1e0] sm:$0xff]
    %v289 = vld [vmem:[%s227 + $0x1e8] sm:$0xff]
    %v290 = vld [vmem:[%s227 + $0x1f0] sm:$0xff]
    %v291 = vld [vmem:[%s227 + $0x1f8] sm:$0xff]
    %292 = vmatpush.msra.mxu0 %v128
    %293 = vmatpush.msra.mxu0 %v126
    %294 = vmatpush.msra.mxu0 %v124
    %295 = vmatpush.msra.mxu0 %v122
    %296 = vmatpush.msra.mxu0 %v120
    %297 = vmatpush.msra.mxu0 %v118
    %298 = vmatpush.msra.mxu0 %v116
    %299 = vmatpush.msra.mxu0 %v114
    %300 = vmatpush.msra.mxu0 %v112
    %301 = vmatpush.msra.mxu0 %v110
    %302 = vmatpush.msra.mxu0 %v108
    %303 = vmatpush.msra.mxu0 %v106
    %304 = vmatpush.msra.mxu0 %v104
    %305 = vmatpush.msra.mxu0 %v102
    %306 = vmatpush.msra.mxu0 %v100
    %307 = vmatpush.msra.mxu0 %v98
    %308 = vmatmul.f32.gmra.mxu0 %v64
    %v309 = vpop.f32.mrf.mxu0
    %v310 = vadd.f32 %v67, %v309
    %311 = vdwg.mxu0
    %312 = vmatpush.msra.mxu0 %v160
    %313 = vmatpush.msra.mxu0 %v158
    %314 = vmatpush.msra.mxu0 %v156
    %315 = vmatpush.msra.mxu0 %v154
    %316 = vmatpush.msra.mxu0 %v152
    %317 = vmatpush.msra.mxu0 %v150
    %318 = vmatpush.msra.mxu0 %v148
    %319 = vmatpush.msra.mxu0 %v146
    %320 = vmatpush.msra.mxu0 %v144
    %321 = vmatpush.msra.mxu0 %v142
    %322 = vmatpush.msra.mxu0 %v140
    %323 = vmatpush.msra.mxu0 %v138
    %324 = vmatpush.msra.mxu0 %v136
    %325 = vmatpush.msra.mxu0 %v134
    %326 = vmatpush.msra.mxu0 %v132
    %327 = vmatpush.msra.mxu0 %v130
    %328 = vmatmul.f32.gmra.mxu0 %v90
    %v329 = vpop.f32.mrf.mxu0
    %v330 = vadd.f32 %v310, %v329
    %331 = vdwg.mxu0
    %332 = vmatpush.msra.mxu0 %v129
    %333 = vmatpush.msra.mxu0 %v127
    %334 = vmatpush.msra.mxu0 %v125
    %335 = vmatpush.msra.mxu0 %v123
    %336 = vmatpush.msra.mxu0 %v121
    %337 = vmatpush.msra.mxu0 %v119
    %338 = vmatpush.msra.mxu0 %v117
    %339 = vmatpush.msra.mxu0 %v115
    %340 = vmatpush.msra.mxu0 %v113
    %341 = vmatpush.msra.mxu0 %v111
    %342 = vmatpush.msra.mxu0 %v109
    %343 = vmatpush.msra.mxu0 %v107
    %344 = vmatpush.msra.mxu0 %v105
    %345 = vmatpush.msra.mxu0 %v103
    %346 = vmatpush.msra.mxu0 %v101
    %347 = vmatpush.msra.mxu0 %v99
    %348 = vmatmul.f32.gmra.mxu0 %v64
    %v349 = vpop.f32.mrf.mxu0
    %v350 = vadd.f32 %v93, %v349
    %351 = vdwg.mxu0
    %352 = vmatpush.msra.mxu0 %v161
    %353 = vmatpush.msra.mxu0 %v159
    %354 = vmatpush.msra.mxu0 %v157
    %355 = vmatpush.msra.mxu0 %v155
    %356 = vmatpush.msra.mxu0 %v153
    %357 = vmatpush.msra.mxu0 %v151
    %358 = vmatpush.msra.mxu0 %v149
    %359 = vmatpush.msra.mxu0 %v147
    %360 = vmatpush.msra.mxu0 %v145
    %361 = vmatpush.msra.mxu0 %v143
    %362 = vmatpush.msra.mxu0 %v141
    %363 = vmatpush.msra.mxu0 %v139
    %364 = vmatpush.msra.mxu0 %v137
    %365 = vmatpush.msra.mxu0 %v135
    %366 = vmatpush.msra.mxu0 %v133
    %367 = vmatpush.msra.mxu0 %v131
    %368 = vmatmul.f32.gmra.mxu0 %v90
    %v369 = vpop.f32.mrf.mxu0
    %v370 = vadd.f32 %v350, %v369
    %371 = vdwg.mxu0
    %372 = vmatpush.msra.mxu0 %v193
    %373 = vmatpush.msra.mxu0 %v191
    %374 = vmatpush.msra.mxu0 %v189
    %375 = vmatpush.msra.mxu0 %v187
    %376 = vmatpush.msra.mxu0 %v185
    %377 = vmatpush.msra.mxu0 %v183
    %378 = vmatpush.msra.mxu0 %v181
    %379 = vmatpush.msra.mxu0 %v179
    %380 = vmatpush.msra.mxu0 %v177
    %381 = vmatpush.msra.mxu0 %v175
    %382 = vmatpush.msra.mxu0 %v173
    %383 = vmatpush.msra.mxu0 %v171
    %384 = vmatpush.msra.mxu0 %v169
    %385 = vmatpush.msra.mxu0 %v167
    %386 = vmatpush.msra.mxu0 %v165
    %387 = vmatpush.msra.mxu0 %v163
    %388 = vmatmul.f32.gmra.mxu0 %v70
    %v389 = vpop.f32.mrf.mxu0
    %v390 = vadd.f32 0.0, %v389
    %391 = vdwg.mxu0
    %392 = vmatpush.msra.mxu0 %v225
    %393 = vmatpush.msra.mxu0 %v223
    %394 = vmatpush.msra.mxu0 %v221
    %395 = vmatpush.msra.mxu0 %v219
    %396 = vmatpush.msra.mxu0 %v217
    %397 = vmatpush.msra.mxu0 %v215
    %398 = vmatpush.msra.mxu0 %v213
    %399 = vmatpush.msra.mxu0 %v211
    %400 = vmatpush.msra.mxu0 %v209
    %401 = vmatpush.msra.mxu0 %v207
    %402 = vmatpush.msra.mxu0 %v205
    %403 = vmatpush.msra.mxu0 %v203
    %404 = vmatpush.msra.mxu0 %v201
    %405 = vmatpush.msra.mxu0 %v199
    %406 = vmatpush.msra.mxu0 %v197
    %407 = vmatpush.msra.mxu0 %v195
    %408 = vmatmul.f32.gmra.mxu0 %v96
    %v409 = vpop.f32.mrf.mxu0
    %v410 = vadd.f32 %v390, %v409
    %411 = vdwg.mxu0
    %412 = vmatpush.msra.mxu0 %v194
    %413 = vmatpush.msra.mxu0 %v192
    %414 = vmatpush.msra.mxu0 %v190
    %415 = vmatpush.msra.mxu0 %v188
    %416 = vmatpush.msra.mxu0 %v186
    %417 = vmatpush.msra.mxu0 %v184
    %418 = vmatpush.msra.mxu0 %v182
    %419 = vmatpush.msra.mxu0 %v180
    %420 = vmatpush.msra.mxu0 %v178
    %421 = vmatpush.msra.mxu0 %v176
    %422 = vmatpush.msra.mxu0 %v174
    %423 = vmatpush.msra.mxu0 %v172
    %424 = vmatpush.msra.mxu0 %v170
    %425 = vmatpush.msra.mxu0 %v168
    %426 = vmatpush.msra.mxu0 %v166
    %427 = vmatpush.msra.mxu0 %v164
    %428 = vmatmul.f32.gmra.mxu0 %v70
    %v429 = vpop.f32.mrf.mxu0
    %v430 = vadd.f32 0.0, %v429
    %431 = vdwg.mxu0
    %432 = vmatpush.msra.mxu0 %v226
    %433 = vmatpush.msra.mxu0 %v224
    %434 = vmatpush.msra.mxu0 %v222
    %435 = vmatpush.msra.mxu0 %v220
    %436 = vmatpush.msra.mxu0 %v218
    %437 = vmatpush.msra.mxu0 %v216
    %438 = vmatpush.msra.mxu0 %v214
    %439 = vmatpush.msra.mxu0 %v212
    %440 = vmatpush.msra.mxu0 %v210
    %441 = vmatpush.msra.mxu0 %v208
    %442 = vmatpush.msra.mxu0 %v206
    %443 = vmatpush.msra.mxu0 %v204
    %444 = vmatpush.msra.mxu0 %v202
    %445 = vmatpush.msra.mxu0 %v200
    %446 = vmatpush.msra.mxu0 %v198
    %447 = vmatpush.msra.mxu0 %v196
    %448 = vmatmul.f32.gmra.mxu0 %v96
    %v449 = vpop.f32.mrf.mxu0
    %v450 = vadd.f32 %v430, %v449
    %451 = vdwg.mxu0
    %v452 = vadd.f32 %v330, %v410
    %v453 = vadd.f32 %v370, %v450
    %455 = vset.pattern.permute.xlu0 0
    %456 = vperm.xlu0 %455, %v24
    %v457 = vpop.permute.xlu0 %456
    %v459 = vadd.f32 %v452, %v457
    %v460 = vadd.f32 %v453, %v457
    %461 = vmatpush.msra.mxu0 %v258
    %462 = vmatpush.msra.mxu0 %v256
    %463 = vmatpush.msra.mxu0 %v254
    %464 = vmatpush.msra.mxu0 %v252
    %465 = vmatpush.msra.mxu0 %v250
    %466 = vmatpush.msra.mxu0 %v248
    %467 = vmatpush.msra.mxu0 %v246
    %468 = vmatpush.msra.mxu0 %v244
    %469 = vmatpush.msra.mxu0 %v242
    %470 = vmatpush.msra.mxu0 %v240
    %471 = vmatpush.msra.mxu0 %v238
    %472 = vmatpush.msra.mxu0 %v236
    %473 = vmatpush.msra.mxu0 %v234
    %474 = vmatpush.msra.mxu0 %v232
    %475 = vmatpush.msra.mxu0 %v230
    %476 = vmatpush.msra.mxu0 %v228
    %477 = vmatmul.f32.gmra.mxu0 %v459
    %v478 = vpop.f32.mrf.mxu0
    %v479 = vadd.f32 0.0, %v478
    %480 = vdwg.mxu0
    %481 = vmatpush.msra.mxu0 %v290
    %482 = vmatpush.msra.mxu0 %v288
    %483 = vmatpush.msra.mxu0 %v286
    %484 = vmatpush.msra.mxu0 %v284
    %485 = vmatpush.msra.mxu0 %v282
    %486 = vmatpush.msra.mxu0 %v280
    %487 = vmatpush.msra.mxu0 %v278
    %488 = vmatpush.msra.mxu0 %v276
    %489 = vmatpush.msra.mxu0 %v274
    %490 = vmatpush.msra.mxu0 %v272
    %491 = vmatpush.msra.mxu0 %v270
    %492 = vmatpush.msra.mxu0 %v268
    %493 = vmatpush.msra.mxu0 %v266
    %494 = vmatpush.msra.mxu0 %v264
    %495 = vmatpush.msra.mxu0 %v262
    %496 = vmatpush.msra.mxu0 %v260
    %497 = vmatmul.f32.gmra.mxu0 %v460
    %v498 = vpop.f32.mrf.mxu0
    %v499 = vadd.f32 %v479, %v498
    %500 = vdwg.mxu0
    %501 = vmatpush.msra.mxu0 %v259
    %502 = vmatpush.msra.mxu0 %v257
    %503 = vmatpush.msra.mxu0 %v255
    %504 = vmatpush.msra.mxu0 %v253
    %505 = vmatpush.msra.mxu0 %v251
    %506 = vmatpush.msra.mxu0 %v249
    %507 = vmatpush.msra.mxu0 %v247
    %508 = vmatpush.msra.mxu0 %v245
    %509 = vmatpush.msra.mxu0 %v243
    %510 = vmatpush.msra.mxu0 %v241
    %511 = vmatpush.msra.mxu0 %v239
    %512 = vmatpush.msra.mxu0 %v237
    %513 = vmatpush.msra.mxu0 %v235
    %514 = vmatpush.msra.mxu0 %v233
    %515 = vmatpush.msra.mxu0 %v231
    %516 = vmatpush.msra.mxu0 %v229
    %517 = vmatmul.f32.gmra.mxu0 %v459
    %v518 = vpop.f32.mrf.mxu0
    %v519 = vadd.f32 0.0, %v518
    %520 = vdwg.mxu0
    %521 = vmatpush.msra.mxu0 %v291
    %522 = vmatpush.msra.mxu0 %v289
    %523 = vmatpush.msra.mxu0 %v287
    %524 = vmatpush.msra.mxu0 %v285
    %525 = vmatpush.msra.mxu0 %v283
    %526 = vmatpush.msra.mxu0 %v281
    %527 = vmatpush.msra.mxu0 %v279
    %528 = vmatpush.msra.mxu0 %v277
    %529 = vmatpush.msra.mxu0 %v275
    %530 = vmatpush.msra.mxu0 %v273
    %531 = vmatpush.msra.mxu0 %v271
    %532 = vmatpush.msra.mxu0 %v269
    %533 = vmatpush.msra.mxu0 %v267
    %534 = vmatpush.msra.mxu0 %v265
    %535 = vmatpush.msra.mxu0 %v263
    %536 = vmatpush.msra.mxu0 %v261
    %537 = vmatmul.f32.gmra.mxu0 %v460
    %v538 = vpop.f32.mrf.mxu0
    %v539 = vadd.f32 %v519, %v538
    %540 = vdwg.mxu0
    %v541 = vld [vmem:[%s3] sm:$0xff]
    %542 = vset.pattern.permute.xlu0 1
    %543 = vperm.xlu0 %542, %v24
    %v544 = vpop.permute.xlu0 %543
    %vm546 = vcmask 130048
    %v548 = vsel %vm546, %v541, 0
    %550 = vmatpush.msra.mxu0 0.0
    %551 = vmatpush.msra.mxu0 0.0
    %552 = vmatpush.msra.mxu0 0.0
    %553 = vmatpush.msra.mxu0 0.0
    %554 = vmatpush.msra.mxu0 0.0
    %555 = vmatpush.msra.mxu0 0.0
    %556 = vmatpush.msra.mxu0 0.0
    %557 = vmatpush.msra.mxu0 0.0
    %558 = vmatpush.msra.mxu0 0.0
    %559 = vmatpush.msra.mxu0 0.0
    %560 = vmatpush.msra.mxu0 0.0
    %561 = vmatpush.msra.mxu0 0.0
    %562 = vmatpush.msra.mxu0 0.0
    %563 = vmatpush.msra.mxu0 0.0
    %564 = vmatpush.msra.mxu0 %v499
    %565 = vmatpush.msra.mxu0 %v459
    %566 = vmatmul.f32.gmra.mxu0 %v548
    %v567 = vpop.f32.mrf.mxu0
    %v568 = vadd.f32 %v544, %v567
    %569 = vdwg.mxu0
    %570 = vmatpush.msra.mxu0 0.0
    %571 = vmatpush.msra.mxu0 0.0
    %572 = vmatpush.msra.mxu0 0.0
    %573 = vmatpush.msra.mxu0 0.0
    %574 = vmatpush.msra.mxu0 0.0
    %575 = vmatpush.msra.mxu0 0.0
    %576 = vmatpush.msra.mxu0 0.0
    %577 = vmatpush.msra.mxu0 0.0
    %578 = vmatpush.msra.mxu0 0.0
    %579 = vmatpush.msra.mxu0 0.0
    %580 = vmatpush.msra.mxu0 0.0
    %581 = vmatpush.msra.mxu0 0.0
    %582 = vmatpush.msra.mxu0 0.0
    %583 = vmatpush.msra.mxu0 0.0
    %584 = vmatpush.msra.mxu0 %v539
    %585 = vmatpush.msra.mxu0 %v460
    %586 = vmatmul.f32.gmra.mxu0 %v548
    %v587 = vpop.f32.mrf.mxu0
    %v588 = vadd.f32 %v544, %v587
    %589 = vdwg.mxu0
    %vm590 = vcmp.ge.f32.partialorder %v568, 0.0
    %vm591 = vcmp.ge.f32.partialorder %v588, 0.0
    %v592 = vmul.f32 %v568, 0.2
    %v593 = vmul.f32 %v588, 0.2
    %v594 = vsel %vm590, %v568, %v592
    %v595 = vsel %vm591, %v588, %v593
    %v596 = vadd.f32 %v594, %v595
    %597 = vadd.xlane.f32.xlu0 %v596
    %v598 = vpop.xlane.xlu0 %597
    %v599 = vmul.f32 %v598, 0.00390625
    %v600 = vmul.f32 %v594, %v594
    %v601 = vmul.f32 %v595, %v595
    %v602 = vadd.f32 %v600, %v601
    %603 = vadd.xlane.f32.xlu0 %v602
    %v604 = vpop.xlane.xlu0 %603
    %v605 = vmul.f32 %v604, 0.00390625
    %v606 = vmul.f32 %v599, %v599
    %v607 = vsub.f32 %v605, %v606
    %v608 = vmax.f32 %v607, 0.0
    %v609 = vadd.f32 %v608, 1e-05
    %v610 = vrsqrt.pop %v609
    %v611 = vmul.f32 %v610, %v609
    %v612 = vmul.f32 %v611, %v610
    %v613 = vmul.f32 0.5, %v612
    %v614 = vsub.f32 1.5, %v613
    %v615 = vmul.f32 %v610, %v614
    %vm616 = vweird.f32 %v609
    %vm617 = vweird.f32 %v610
    %vm618 = vmor %vm616, %vm617
    %v619 = vsel %vm618, %v610, %v615
    %v620 = vmul.f32 %v24, %v619
    %622 = vset.pattern.permute.xlu0 2
    %623 = vperm.xlu0 %622, %v620
    %v624 = vpop.permute.xlu0 %623
    %v626 = vmul.f32 %v594, %v624
    %v627 = vmul.f32 %v595, %v624
    %v628 = vmul.f32 %v599, %v620
    %630 = vrot.lane.b32.xlu0 %v628, 1
    %v631 = vpop.permute.xlu0 %630
    %v633 = vsub.f32 %v24, %v631
    %635 = vset.pattern.permute.xlu0 3
    %636 = vperm.xlu0 %635, %v633
    %v637 = vpop.permute.xlu0 %636
    %v639 = vadd.f32 %v626, %v637
    %v640 = vadd.f32 %v627, %v637
    %641 = vst [vmem:[#allocation2] sm:$0xff] %v639
    %642 = vst [vmem:[#allocation2 + $0x8] sm:$0xff] %v640
    // Predicated region
    $region26: #{context_block_forward.1} parent=1 // pred_check
      _
    $region27: #{context_block_forward.1} parent=1 // pred_check_branch
      %644 = sbr.rel (0) target = $region29
    $region28: #{context_block_forward.1} parent=1 // pred_region
      %646 = vsyncadd [#allocation3], 0
      %s648 = sshll.u32 [#allocation2], 4
      %s649 = int_to_ptr.vmem [resolvable:$true] %s648
      %s650 = sshll.u32 %s6, 4
      %s651 = int_to_ptr.hbm [resolvable:$true] %s650
      %653 = dma.vmem_to_hbm [thread:$0]  %s649, 256, %s651, [#allocation3]
    $region29: #{context_block_forward.1} parent=1 // pred_fallthru
      _
    // Predicated region
    $region30: #{context_block_forward.1} parent=1 // pred_check
      _
    $region31: #{context_block_forward.1} parent=1 // pred_check_branch
      %655 = sbr.rel (0) target = $region33
    $region32: #{context_block_forward.1} parent=1 // pred_region
      %657 = dma.done [#allocation3], 256
    $region33: #{context_block_forward.1} parent=1 // pred_fallthru
      _
    %658 = vsyncpa [#allocation3], 1

</llo_original>
